<compile_context>
chip_gen: v6e
topology: v6e:2x2x1
jax: 0.10.0
libtpu: 0.0.40
codegen_flags: <defaults>
</compile_context>

<pallas_src>
import jax
import jax.numpy as jnp
from jax.experimental import pallas as pl
from jax.experimental.pallas import tpu as pltpu


def _round_up(x, m):
    return (x + m - 1) // m * m


def mf_kernel(uid_ref, iid_ref, user_tab_t_ref, item_tab_t_ref, out_ref):
    # uid_ref / iid_ref : VMEM int32 (1, TB)  -- this grid step's id tile
    # user_tab_t_ref    : VMEM (D, Vu)        -- resident, pre-transposed table
    # item_tab_t_ref    : VMEM (D, Vi)        -- resident, pre-transposed table
    # out_ref           : VMEM f32 (1, TB)    -- lane-dense output row
    tb = uid_ref.shape[1]
    vu = user_tab_t_ref.shape[1]
    vi = item_tab_t_ref.shape[1]
    dtype = user_tab_t_ref.dtype

    # One-hot selection matrices, shape (V, TB): element (v, b) is 1 iff
    # ids[b] == v.  Out-of-range ids give an all-zero column (score 0).
    oh_u = (jax.lax.broadcasted_iota(jnp.int32, (vu, tb), 0)
            == uid_ref[...]).astype(dtype)
    oh_i = (jax.lax.broadcasted_iota(jnp.int32, (vi, tb), 0)
            == iid_ref[...]).astype(dtype)

    # Gather-as-matmul on the MXU with f32 accumulation:
    #   (D, V) @ (V, TB) -> (D, TB), feature-major / lane-dense.
    u_t = jnp.dot(user_tab_t_ref[...], oh_u, preferred_element_type=jnp.float32)
    i_t = jnp.dot(item_tab_t_ref[...], oh_i, preferred_element_type=jnp.float32)

    # Lane-dense elementwise product, then a sublane (feature-dim) reduce:
    # the result is natively a (1, TB) lane-major row -- no XLU transpose.
    out_ref[...] = jnp.sum(u_t * i_t, axis=0, keepdims=True).astype(out_ref.dtype)


def mf_forward(user_emb_table, item_emb_table, user_id, item_id, *, max_tile=512):
    """Matrix-factorization score: sum(user_emb[user_id] * item_emb[item_id], -1)."""
    vu, d = user_emb_table.shape
    vi, d2 = item_emb_table.shape
    assert d == d2, "embedding dims must match"
    b = int(user_id.shape[0])

    # Batch tile: a multiple of 128 lanes, capped at max_tile, and capped at
    # ~half the 128-rounded batch so batches >= 256 give >= 2 grid steps
    # (lets "parallel" shard across v7x's 2 TensorCores; no effect on v5e/v6e).
    b128 = _round_up(max(b, 1), 128)
    tb = min(max_tile, max(128, _round_up(b128 // 2, 128)))
    b_pad = _round_up(b, tb)
    num_tiles = b_pad // tb

    # Padded rows use id 0; their (garbage) scores are sliced off at the end.
    uid = jnp.zeros((1, b_pad), jnp.int32).at[0, :b].set(user_id.astype(jnp.int32))
    iid = jnp.zeros((1, b_pad), jnp.int32).at[0, :b].set(item_id.astype(jnp.int32))

    # Pre-transpose the tables once (outside the kernel) so gathered
    # activations land feature-major (D, TB).
    user_t = jnp.asarray(user_emb_table).T   # (D, Vu)
    item_t = jnp.asarray(item_emb_table).T   # (D, Vi)

    itemsize = jnp.dtype(user_t.dtype).itemsize
    tab_bytes = (user_t.size + item_t.size) * itemsize

    # Per-generation VMEM cap (v5e/v6e: 128 MiB, v7x: 64 MiB per TC).
    try:
        info = pltpu.get_tpu_info()
        vmem_cap = getattr(info, "vmem_capacity_bytes", 64 * 1024 * 1024)
    except Exception:
        vmem_cap = 64 * 1024 * 1024  # conservative fallback (v7x per-TC)

    vmem_needed = (
        2 * tab_bytes                      # resident tables (default 2-deep buffers,
                                           # fetched once thanks to constant index map)
        + 2 * 2 * tb * 4                   # two id blocks, double-buffered
        + 2 * tb * 4                       # output block, double-buffered
        + (vu + vi) * tb * itemsize        # one-hot matrices
        + 2 * d * tb * 4                   # gathered (D, TB) activations, f32
        + (2 << 20)                        # headroom
    )
    vmem_limit = int(min(max(vmem_needed, 16 * 1024 * 1024), int(0.85 * vmem_cap)))

    cost = pl.CostEstimate(
        flops=int(2 * d * (vu + vi) * b_pad + 3 * b_pad * d),
        transcendentals=0,
        bytes_accessed=int(tab_bytes + 2 * b_pad * 4 + b_pad * 4),
    )

    grid_spec = pltpu.PrefetchScalarGridSpec(
        num_scalar_prefetch=0,
        grid=(num_tiles,),
        in_specs=[
            pl.BlockSpec((1, tb), lambda bidx: (0, bidx)),   # user ids tile
            pl.BlockSpec((1, tb), lambda bidx: (0, bidx)),   # item ids tile
            # Full tables, same block every step -> DMA'd once, VMEM-resident.
            pl.BlockSpec((d, vu), lambda bidx: (0, 0)),
            pl.BlockSpec((d, vi), lambda bidx: (0, 0)),
        ],
        out_specs=pl.BlockSpec((1, tb), lambda bidx: (0, bidx)),
    )

    out = pl.pallas_call(
        mf_kernel,
        out_shape=jax.ShapeDtypeStruct((1, b_pad), jnp.float32),
        grid_spec=grid_spec,
        compiler_params=pltpu.CompilerParams(
            dimension_semantics=("parallel",),
            vmem_limit_bytes=vmem_limit,
        ),
        cost_estimate=cost,
    )(uid, iid, user_t, item_t)

    return out[0, :b]  # [B]


if __name__ == "__main__":
    # Synthetic "args": user_cnt=64, item_cnt=128, emb_hid_dim=32, batch=8.
    user_cnt, item_cnt, emb_hid_dim, batch = 64, 128, 32, 8

    key = jax.random.PRNGKey(0)
    k_u, k_i, k_uid, k_iid = jax.random.split(key, 4)

    # nn.Embedding default init ~ N(0, 1), deterministic here.
    user_embedding = jax.random.normal(k_u, (user_cnt, emb_hid_dim), jnp.float32)
    item_embedding = jax.random.normal(k_i, (item_cnt, emb_hid_dim), jnp.float32)

    user_id = jax.random.randint(k_uid, (batch,), 0, user_cnt, jnp.int32)
    item_id = jax.random.randint(k_iid, (batch,), 0, item_cnt, jnp.int32)

    out = mf_forward(user_embedding, item_embedding, user_id, item_id)
    out = jax.block_until_ready(out)

    # Pure-JAX reference check.
    ref = jnp.sum(
        jnp.take(user_embedding, user_id, axis=0)
        * jnp.take(item_embedding, item_id, axis=0),
        axis=1,
    )
    assert out.shape == (batch,)
    assert jnp.allclose(out, ref, rtol=1e-5, atol=1e-5), "mismatch vs reference"

    print("KERNEL_OK")
</pallas_src>

<mosaic_0001>
module attributes {stable_mosaic.version = 11 : i64} {
  func.func @mf_kernel(%arg0: i32, %arg1: memref<1x128xi32, #tpu.memory_space<vmem>>, %arg2: memref<1x128xi32, #tpu.memory_space<vmem>>, %arg3: memref<32x64xf32, #tpu.memory_space<vmem>>, %arg4: memref<32x128xf32, #tpu.memory_space<vmem>>, %arg5: memref<1x128xf32, #tpu.memory_space<vmem>>) attributes {dimension_semantics = [#tpu.dimension_semantics<parallel>], iteration_bounds = array<i64: 1>, scalar_prefetch = 0 : i64, scratch_operands = 0 : i64, tpu.core_type = #tpu.core_type<tc>, window_params = [{transform_indices = @transform_0, window_bounds = array<i64: 1, 128>}, {transform_indices = @transform_1, window_bounds = array<i64: 1, 128>}, {pipeline_mode = #tpu.pipeline_mode<synchronous>, transform_indices = @transform_2, window_bounds = array<i64: 32, 64>}, {pipeline_mode = #tpu.pipeline_mode<synchronous>, transform_indices = @transform_3, window_bounds = array<i64: 32, 128>}, {transform_indices = @transform_4, window_bounds = array<i64: 1, 128>}]} {
    %0 = tpu.iota {dimensions = array<i32: 0>} : vector<64x128xi32>
    %c0 = arith.constant 0 : index
    %c0_0 = arith.constant 0 : index
    %1 = vector.load %arg1[%c0, %c0_0] : memref<1x128xi32, #tpu.memory_space<vmem>>, vector<1x128xi32>
    %2 = vector.broadcast %1 : vector<1x128xi32> to vector<64x128xi32>
    %3 = arith.cmpi eq, %0, %2 : vector<64x128xi32>
    %4 = arith.extui %3 : vector<64x128xi1> to vector<64x128xi32>
    %5 = arith.sitofp %4 : vector<64x128xi32> to vector<64x128xf32>
    %6 = tpu.iota {dimensions = array<i32: 0>} : vector<128x128xi32>
    %c0_1 = arith.constant 0 : index
    %c0_2 = arith.constant 0 : index
    %7 = vector.load %arg2[%c0_1, %c0_2] : memref<1x128xi32, #tpu.memory_space<vmem>>, vector<1x128xi32>
    %8 = vector.broadcast %7 : vector<1x128xi32> to vector<128x128xi32>
    %9 = arith.cmpi eq, %6, %8 : vector<128x128xi32>
    %10 = arith.extui %9 : vector<128x128xi1> to vector<128x128xi32>
    %11 = arith.sitofp %10 : vector<128x128xi32> to vector<128x128xf32>
    %c0_3 = arith.constant 0 : index
    %c0_4 = arith.constant 0 : index
    %12 = vector.load %arg3[%c0_3, %c0_4] : memref<32x64xf32, #tpu.memory_space<vmem>>, vector<32x64xf32>
    %cst = arith.constant dense<0.000000e+00> : vector<32x128xf32>
    %13 = tpu.matmul %12, %5, %cst {dimension_numbers = #tpu.dot_dimension_numbers<[1], [0], [0], [1], [0, 0, 1, 1], [], []>} : vector<32x64xf32>, vector<64x128xf32>, vector<32x128xf32> -> vector<32x128xf32>
    %c0_5 = arith.constant 0 : index
    %c0_6 = arith.constant 0 : index
    %14 = vector.load %arg4[%c0_5, %c0_6] : memref<32x128xf32, #tpu.memory_space<vmem>>, vector<32x128xf32>
    %cst_7 = arith.constant dense<0.000000e+00> : vector<32x128xf32>
    %15 = tpu.matmul %14, %11, %cst_7 {dimension_numbers = #tpu.dot_dimension_numbers<[1], [0], [0], [1], [0, 0, 1, 1], [], []>} : vector<32x128xf32>, vector<128x128xf32>, vector<32x128xf32> -> vector<32x128xf32>
    %16 = arith.mulf %13, %15 : vector<32x128xf32>
    %cst_8 = arith.constant dense<0.000000e+00> : vector<128xf32>
    %17 = vector.multi_reduction <add>, %16, %cst_8 [0] : vector<32x128xf32> to vector<128xf32>
    %18 = vector.shape_cast %17 : vector<128xf32> to vector<1x128xf32>
    %c0_9 = arith.constant 0 : index
    %c0_10 = arith.constant 0 : index
    %19 = vector.load %arg5[%c0_9, %c0_10] : memref<1x128xf32, #tpu.memory_space<vmem>>, vector<1x128xf32>
    tpu.vector_store %arg5[%c0_9, %c0_10], %18 {strides = array<i32>} : memref<1x128xf32, #tpu.memory_space<vmem>>, vector<1x128xf32>,
    return
  }
  func.func @transform_0(%arg0: i32) -> (i32, i32) {
    %c0_i32 = arith.constant 0 : i32
    %c0_i32_0 = arith.constant 0 : i32
    return %c0_i32, %arg0 : i32, i32
  }
  func.func @transform_1(%arg0: i32) -> (i32, i32) {
    %c0_i32 = arith.constant 0 : i32
    %c0_i32_0 = arith.constant 0 : i32
    return %c0_i32, %arg0 : i32, i32
  }
  func.func @transform_2(%arg0: i32) -> (i32, i32) {
    %c0_i32 = arith.constant 0 : i32
    %c0_i32_0 = arith.constant 0 : i32
    %c0_i32_1 = arith.constant 0 : i32
    return %c0_i32, %c0_i32_0 : i32, i32
  }
  func.func @transform_3(%arg0: i32) -> (i32, i32) {
    %c0_i32 = arith.constant 0 : i32
    %c0_i32_0 = arith.constant 0 : i32
    %c0_i32_1 = arith.constant 0 : i32
    return %c0_i32, %c0_i32_0 : i32, i32
  }
  func.func @transform_4(%arg0: i32) -> (i32, i32) {
    %c0_i32 = arith.constant 0 : i32
    %c0_i32_0 = arith.constant 0 : i32
    return %c0_i32, %arg0 : i32, i32
  }
}

</mosaic_0001>

<llo_original>
// kernel: tpu_custom_call.1
$region0: #{tpu_custom_call.1}
  #allocation0 [shape = 'u32[]', space=smem, size = 0x4, offset = 0x4, fixed_abs, tag = 'smem constant byte address 0x4 - core index']
  #allocation1 [shape = 'u32[144,128]{1,0:T(1,128)}', space=vmem, size = 0x12000, scoped, tag = 'internal scratch']
  %s0 = inlined_call_operand.hbm [shape: s32[1,128], index: 0, kind: input, shape index: {}]
  %s1 = inlined_call_operand.vmem [shape: s32[1,128], index: 1, kind: input, shape index: {}]
  %s2 = inlined_call_operand.hbm [shape: f32[32,64], index: 2, kind: input, shape index: {}]
  %s3 = inlined_call_operand.hbm [shape: f32[32,128], index: 3, kind: input, shape index: {}]
  %s4 = inlined_call_operand.hbm [shape: f32[1,128], index: 4, kind: output, shape index: {}]
  %s5 = sld [smem:[#allocation0]]
  $region38: #{tpu_custom_call.1} parent=0
    _
  %s7 = ssub.s32 1, %s5
  %s8 = scalar_select 0, %s7, %s5
  $region1: #{tpu_custom_call.1} parent=0
    #allocation2 [shape = 'u8[512]{0}', space=vmem, size = 0x400, scoped, tag = 'input window, operand 0, single buffered']
    #allocation3 [shape = 's32[1]{0}', space=sflag, size = 0x4, scoped, tag = 'scoped memory for tpu_custom_call.1']
    #allocation4 [shape = 's32[1]{0}', space=sflag, size = 0x4, scoped, tag = 'scoped memory for tpu_custom_call.1']
    #allocation5 [shape = 'u8[16384]{0}', space=vmem, size = 0x4000, scoped, tag = 'input window, operand 2, single buffered']
    #allocation6 [shape = 's32[1]{0}', space=sflag, size = 0x4, scoped, tag = 'scoped memory for tpu_custom_call.1']
    #allocation7 [shape = 'u8[16384]{0}', space=vmem, size = 0x4000, scoped, tag = 'input window, operand 3, single buffered']
    #allocation8 [shape = 'u8[512]{0}', space=vmem, size = 0x400, scoped, tag = 'output window, operand 0, single buffered']
    %9 = vsyncpa [#allocation3], 0
    %10 = vsyncpa [#allocation6], 0
    %11 = vsyncpa [#allocation4], 0
    // Predicated region
    $region2: #{tpu_custom_call.1} parent=1 // pred_check
      _
    $region3: #{tpu_custom_call.1} parent=1 // pred_check_branch
      %13 = sbr.rel (0) target = $region5
    $region4: #{tpu_custom_call.1} parent=1 // pred_region
      %s15 = ssub.s32 16, 16
      %16 = vsyncadd [#allocation3], %s15
      %s18 = sshll.u32 [#allocation2], 4
      %s19 = int_to_ptr.vmem [resolvable:$true] %s18
      %21 = dma.hbm_to_vmem [thread:$0]  %s0, 16, %s19, [#allocation3]
    $region5: #{tpu_custom_call.1} parent=1 // pred_fallthru
      _
    // Predicated region
    $region6: #{tpu_custom_call.1} parent=1 // pred_check
      _
    $region7: #{tpu_custom_call.1} parent=1 // pred_check_branch
      %23 = sbr.rel (0) target = $region9
    $region8: #{tpu_custom_call.1} parent=1 // pred_region
      _
    $region9: #{tpu_custom_call.1} parent=1 // pred_fallthru
      _
    // Predicated region
    $region10: #{tpu_custom_call.1} parent=1 // pred_check
      _
    $region11: #{tpu_custom_call.1} parent=1 // pred_check_branch
      %25 = sbr.rel (0) target = $region13
    $region12: #{tpu_custom_call.1} parent=1 // pred_region
      %s27 = ssub.s32 512, 512
      %28 = vsyncadd [#allocation6], %s27
      %s29 = sshll.u32 [#allocation5], 4
      %s30 = int_to_ptr.vmem [resolvable:$true] %s29
      %35 = dma.hbm_to_vmem [thread:$0]  %s2, 512, %s30, [#allocation6], 128, 128, 8
    $region13: #{tpu_custom_call.1} parent=1 // pred_fallthru
      _
    // Predicated region
    $region14: #{tpu_custom_call.1} parent=1 // pred_check
      _
    $region15: #{tpu_custom_call.1} parent=1 // pred_check_branch
      %37 = sbr.rel (0) target = $region17
    $region16: #{tpu_custom_call.1} parent=1 // pred_region
      %s39 = ssub.s32 512, 512
      %40 = vsyncadd [#allocation6], %s39
      %s41 = sshll.u32 [#allocation7], 4
      %s42 = int_to_ptr.vmem [resolvable:$true] %s41
      %47 = dma.hbm_to_vmem [thread:$0]  %s3, 512, %s42, [#allocation6], 128, 128, 8
    $region17: #{tpu_custom_call.1} parent=1 // pred_fallthru
      _
    // Predicated region
    $region18: #{tpu_custom_call.1} parent=1 // pred_check
      _
    $region19: #{tpu_custom_call.1} parent=1 // pred_check_branch
      %49 = sbr.rel (0) target = $region21
    $region20: #{tpu_custom_call.1} parent=1 // pred_region
      %50 = dma.done [#allocation3], 16
    $region21: #{tpu_custom_call.1} parent=1 // pred_fallthru
      _
    // Predicated region
    $region22: #{tpu_custom_call.1} parent=1 // pred_check
      _
    $region23: #{tpu_custom_call.1} parent=1 // pred_check_branch
      %52 = sbr.rel (0) target = $region25
    $region24: #{tpu_custom_call.1} parent=1 // pred_region
      %53 = dma.done [#allocation6], 512
    $region25: #{tpu_custom_call.1} parent=1 // pred_fallthru
      _
    // Predicated region
    $region26: #{tpu_custom_call.1} parent=1 // pred_check
      _
    $region27: #{tpu_custom_call.1} parent=1 // pred_check_branch
      %55 = sbr.rel (0) target = $region29
    $region28: #{tpu_custom_call.1} parent=1 // pred_region
      %56 = dma.done [#allocation6], 512
    $region29: #{tpu_custom_call.1} parent=1 // pred_fallthru
      _
    %v57 = vlaneseq
    %v58 = vshrl.u32 %v57, 7
    %v59 = vadd.s32 %v58, 8
    %v60 = vadd.s32 %v58, 16
    %v61 = vadd.s32 %v58, 24
    %v62 = vadd.s32 %v58, 32
    %v63 = vadd.s32 %v58, 40
    %v64 = vadd.s32 %v58, 48
    %v65 = vadd.s32 %v58, 56
    %v66 = vld [vmem:[#allocation2] sm:$0x1]
    %v67 = vlaneseq
    %v68 = vshrl.u32 %v67, 7
    %v69 = vsub.s32 0, %v68
    %v70 = vrot.slane %v66, %v69
    %vm71 = vcmp.eq.s32.totalorder %v58, %v70
    %vm72 = vcmp.eq.s32.totalorder %v59, %v70
    %vm73 = vcmp.eq.s32.totalorder %v60, %v70
    %vm74 = vcmp.eq.s32.totalorder %v61, %v70
    %vm75 = vcmp.eq.s32.totalorder %v62, %v70
    %vm76 = vcmp.eq.s32.totalorder %v63, %v70
    %vm77 = vcmp.eq.s32.totalorder %v64, %v70
    %vm78 = vcmp.eq.s32.totalorder %v65, %v70
    %v79 = vsel %vm71, 1, 0
    %v80 = vsel %vm72, 1, 0
    %v81 = vsel %vm73, 1, 0
    %v82 = vsel %vm74, 1, 0
    %v83 = vsel %vm75, 1, 0
    %v84 = vsel %vm76, 1, 0
    %v85 = vsel %vm77, 1, 0
    %v86 = vsel %vm78, 1, 0
    %v87 = vcvt.s32.f32 %v79
    %v88 = vcvt.s32.f32 %v80
    %v89 = vcvt.s32.f32 %v81
    %v90 = vcvt.s32.f32 %v82
    %v91 = vcvt.s32.f32 %v83
    %v92 = vcvt.s32.f32 %v84
    %v93 = vcvt.s32.f32 %v85
    %v94 = vcvt.s32.f32 %v86
    %v95 = vadd.s32 %v58, 64
    %v96 = vadd.s32 %v58, 72
    %v97 = vadd.s32 %v58, 80
    %v98 = vadd.s32 %v58, 88
    %v99 = vadd.s32 %v58, 96
    %v100 = vadd.s32 %v58, 104
    %v101 = vadd.s32 %v58, 112
    %v102 = vadd.s32 %v58, 120
    %v103 = vld [vmem:[%s1] sm:$0x1]
    %v104 = vlaneseq
    %v105 = vshrl.u32 %v104, 7
    %v106 = vsub.s32 0, %v105
    %v107 = vrot.slane %v103, %v106
    %vm108 = vcmp.eq.s32.totalorder %v58, %v107
    %vm109 = vcmp.eq.s32.totalorder %v59, %v107
    %vm110 = vcmp.eq.s32.totalorder %v60, %v107
    %vm111 = vcmp.eq.s32.totalorder %v61, %v107
    %vm112 = vcmp.eq.s32.totalorder %v62, %v107
    %vm113 = vcmp.eq.s32.totalorder %v63, %v107
    %vm114 = vcmp.eq.s32.totalorder %v64, %v107
    %vm115 = vcmp.eq.s32.totalorder %v65, %v107
    %vm116 = vcmp.eq.s32.totalorder %v95, %v107
    %vm117 = vcmp.eq.s32.totalorder %v96, %v107
    %vm118 = vcmp.eq.s32.totalorder %v97, %v107
    %vm119 = vcmp.eq.s32.totalorder %v98, %v107
    %vm120 = vcmp.eq.s32.totalorder %v99, %v107
    %vm121 = vcmp.eq.s32.totalorder %v100, %v107
    %vm122 = vcmp.eq.s32.totalorder %v101, %v107
    %vm123 = vcmp.eq.s32.totalorder %v102, %v107
    %v124 = vsel %vm108, 1, 0
    %v125 = vsel %vm109, 1, 0
    %v126 = vsel %vm110, 1, 0
    %v127 = vsel %vm111, 1, 0
    %v128 = vsel %vm112, 1, 0
    %v129 = vsel %vm113, 1, 0
    %v130 = vsel %vm114, 1, 0
    %v131 = vsel %vm115, 1, 0
    %v132 = vsel %vm116, 1, 0
    %v133 = vsel %vm117, 1, 0
    %v134 = vsel %vm118, 1, 0
    %v135 = vsel %vm119, 1, 0
    %v136 = vsel %vm120, 1, 0
    %v137 = vsel %vm121, 1, 0
    %v138 = vsel %vm122, 1, 0
    %v139 = vsel %vm123, 1, 0
    %v140 = vcvt.s32.f32 %v124
    %v141 = vcvt.s32.f32 %v125
    %v142 = vcvt.s32.f32 %v126
    %v143 = vcvt.s32.f32 %v127
    %v144 = vcvt.s32.f32 %v128
    %v145 = vcvt.s32.f32 %v129
    %v146 = vcvt.s32.f32 %v130
    %v147 = vcvt.s32.f32 %v131
    %v148 = vcvt.s32.f32 %v132
    %v149 = vcvt.s32.f32 %v133
    %v150 = vcvt.s32.f32 %v134
    %v151 = vcvt.s32.f32 %v135
    %v152 = vcvt.s32.f32 %v136
    %v153 = vcvt.s32.f32 %v137
    %v154 = vcvt.s32.f32 %v138
    %v155 = vcvt.s32.f32 %v139
    %v156 = vld [vmem:[#allocation5] sm:$0xff]
    %v157 = vld [vmem:[#allocation5 + $0x8] sm:$0xff]
    %v158 = vld [vmem:[#allocation5 + $0x10] sm:$0xff]
    %v159 = vld [vmem:[#allocation5 + $0x18] sm:$0xff]
    %vm160 = vcmask 523264
    %v162 = vsel %vm160, %v156, 0
    %v165 = vsel %vm160, %v157, 0
    %v168 = vsel %vm160, %v158, 0
    %v171 = vsel %vm160, %v159, 0
    %173 = vmatprep.subr.mxu0 0.0
    %174 = vmatpush1.msra.mxu0 0.0
    %175 = vmatprep.subr.mxu0 0.0
    %176 = vmatpush1.msra.mxu0 0.0
    %177 = vmatprep.subr.mxu0 0.0
    %178 = vmatpush1.msra.mxu0 0.0
    %179 = vmatprep.subr.mxu0 0.0
    %180 = vmatpush1.msra.mxu0 0.0
    %181 = vmatprep.subr.mxu0 0.0
    %182 = vmatpush1.msra.mxu0 0.0
    %183 = vmatprep.subr.mxu0 0.0
    %184 = vmatpush1.msra.mxu0 0.0
    %185 = vmatprep.subr.mxu0 0.0
    %186 = vmatpush1.msra.mxu0 0.0
    %187 = vmatprep.subr.mxu0 0.0
    %188 = vmatpush1.msra.mxu0 0.0
    %189 = vmatprep.subr.mxu0 0.0
    %190 = vmatpush1.msra.mxu0 %v94
    %191 = vmatprep.subr.mxu0 0.0
    %192 = vmatpush1.msra.mxu0 %v93
    %193 = vmatprep.subr.mxu0 0.0
    %194 = vmatpush1.msra.mxu0 %v92
    %195 = vmatprep.subr.mxu0 0.0
    %196 = vmatpush1.msra.mxu0 %v91
    %197 = vmatprep.subr.mxu0 0.0
    %198 = vmatpush1.msra.mxu0 %v90
    %199 = vmatprep.subr.mxu0 0.0
    %200 = vmatpush1.msra.mxu0 %v89
    %201 = vmatprep.subr.mxu0 0.0
    %202 = vmatpush1.msra.mxu0 %v88
    %203 = vmatprep.subr.mxu0 0.0
    %204 = vmatpush1.msra.mxu0 %v87
    %205 = vmatprep.subr.mxu0 0.0
    %206 = vmatpush2.msra.mxu0 0.0
    %207 = vmatprep.subr.mxu0 0.0
    %208 = vmatpush2.msra.mxu0 0.0
    %209 = vmatprep.subr.mxu0 0.0
    %210 = vmatpush2.msra.mxu0 0.0
    %211 = vmatprep.subr.mxu0 0.0
    %212 = vmatpush2.msra.mxu0 0.0
    %213 = vmatprep.subr.mxu0 0.0
    %214 = vmatpush2.msra.mxu0 0.0
    %215 = vmatprep.subr.mxu0 0.0
    %216 = vmatpush2.msra.mxu0 0.0
    %217 = vmatprep.subr.mxu0 0.0
    %218 = vmatpush2.msra.mxu0 0.0
    %219 = vmatprep.subr.mxu0 0.0
    %220 = vmatpush2.msra.mxu0 0.0
    %221 = vmatprep.subr.mxu0 0.0
    %222 = vmatpush2.msra.mxu0 0.0
    %223 = vmatprep.subr.mxu0 0.0
    %224 = vmatpush2.msra.mxu0 0.0
    %225 = vmatprep.subr.mxu0 0.0
    %226 = vmatpush2.msra.mxu0 0.0
    %227 = vmatprep.subr.mxu0 0.0
    %228 = vmatpush2.msra.mxu0 0.0
    %229 = vmatprep.subr.mxu0 0.0
    %230 = vmatpush2.msra.mxu0 0.0
    %231 = vmatprep.subr.mxu0 0.0
    %232 = vmatpush2.msra.mxu0 0.0
    %233 = vmatprep.subr.mxu0 0.0
    %234 = vmatpush2.msra.mxu0 0.0
    %235 = vmatprep.subr.mxu0 0.0
    %236 = vmatpush2.msra.mxu0 0.0
    %237 = vmatprep.mubr.f32.mxu0 0.0
    %238 = vmatmul.mubr.f32.gmra.mxu0 %v162
    %v239 = vpop.f32.mrf.mxu0
    %v240 = vadd.f32 0.0, %v239
    %v241 = vpop.f32.mrf.mxu0
    %242 = vmatprep.mubr.f32.mxu0 0.0
    %243 = vmatmul.mubr.f32.gmra.mxu0 %v165
    %v244 = vpop.f32.mrf.mxu0
    %v245 = vadd.f32 0.0, %v244
    %v246 = vpop.f32.mrf.mxu0
    %247 = vmatprep.mubr.f32.mxu0 0.0
    %248 = vmatmul.mubr.f32.gmra.mxu0 %v168
    %v249 = vpop.f32.mrf.mxu0
    %v250 = vadd.f32 0.0, %v249
    %v251 = vpop.f32.mrf.mxu0
    %252 = vmatprep.mubr.f32.mxu0 0.0
    %253 = vmatmul.mubr.f32.gmra.mxu0 %v171
    %v254 = vpop.f32.mrf.mxu0
    %v255 = vadd.f32 0.0, %v254
    %v256 = vpop.f32.mrf.mxu0
    %257 = vdwg.mxu0
    %v258 = vld [vmem:[#allocation7] sm:$0xff]
    %v259 = vld [vmem:[#allocation7 + $0x8] sm:$0xff]
    %v260 = vld [vmem:[#allocation7 + $0x10] sm:$0xff]
    %v261 = vld [vmem:[#allocation7 + $0x18] sm:$0xff]
    %262 = vmatprep.subr.mxu0 0.0
    %263 = vmatpush1.msra.mxu0 %v155
    %264 = vmatprep.subr.mxu0 0.0
    %265 = vmatpush1.msra.mxu0 %v154
    %266 = vmatprep.subr.mxu0 0.0
    %267 = vmatpush1.msra.mxu0 %v153
    %268 = vmatprep.subr.mxu0 0.0
    %269 = vmatpush1.msra.mxu0 %v152
    %270 = vmatprep.subr.mxu0 0.0
    %271 = vmatpush1.msra.mxu0 %v151
    %272 = vmatprep.subr.mxu0 0.0
    %273 = vmatpush1.msra.mxu0 %v150
    %274 = vmatprep.subr.mxu0 0.0
    %275 = vmatpush1.msra.mxu0 %v149
    %276 = vmatprep.subr.mxu0 0.0
    %277 = vmatpush1.msra.mxu0 %v148
    %278 = vmatprep.subr.mxu0 0.0
    %279 = vmatpush1.msra.mxu0 %v147
    %280 = vmatprep.subr.mxu0 0.0
    %281 = vmatpush1.msra.mxu0 %v146
    %282 = vmatprep.subr.mxu0 0.0
    %283 = vmatpush1.msra.mxu0 %v145
    %284 = vmatprep.subr.mxu0 0.0
    %285 = vmatpush1.msra.mxu0 %v144
    %286 = vmatprep.subr.mxu0 0.0
    %287 = vmatpush1.msra.mxu0 %v143
    %288 = vmatprep.subr.mxu0 0.0
    %289 = vmatpush1.msra.mxu0 %v142
    %290 = vmatprep.subr.mxu0 0.0
    %291 = vmatpush1.msra.mxu0 %v141
    %292 = vmatprep.subr.mxu0 0.0
    %293 = vmatpush1.msra.mxu0 %v140
    %294 = vmatprep.subr.mxu0 0.0
    %295 = vmatpush2.msra.mxu0 0.0
    %296 = vmatprep.subr.mxu0 0.0
    %297 = vmatpush2.msra.mxu0 0.0
    %298 = vmatprep.subr.mxu0 0.0
    %299 = vmatpush2.msra.mxu0 0.0
    %300 = vmatprep.subr.mxu0 0.0
    %301 = vmatpush2.msra.mxu0 0.0
    %302 = vmatprep.subr.mxu0 0.0
    %303 = vmatpush2.msra.mxu0 0.0
    %304 = vmatprep.subr.mxu0 0.0
    %305 = vmatpush2.msra.mxu0 0.0
    %306 = vmatprep.subr.mxu0 0.0
    %307 = vmatpush2.msra.mxu0 0.0
    %308 = vmatprep.subr.mxu0 0.0
    %309 = vmatpush2.msra.mxu0 0.0
    %310 = vmatprep.subr.mxu0 0.0
    %311 = vmatpush2.msra.mxu0 0.0
    %312 = vmatprep.subr.mxu0 0.0
    %313 = vmatpush2.msra.mxu0 0.0
    %314 = vmatprep.subr.mxu0 0.0
    %315 = vmatpush2.msra.mxu0 0.0
    %316 = vmatprep.subr.mxu0 0.0
    %317 = vmatpush2.msra.mxu0 0.0
    %318 = vmatprep.subr.mxu0 0.0
    %319 = vmatpush2.msra.mxu0 0.0
    %320 = vmatprep.subr.mxu0 0.0
    %321 = vmatpush2.msra.mxu0 0.0
    %322 = vmatprep.subr.mxu0 0.0
    %323 = vmatpush2.msra.mxu0 0.0
    %324 = vmatprep.subr.mxu0 0.0
    %325 = vmatpush2.msra.mxu0 0.0
    %326 = vmatprep.mubr.f32.mxu0 0.0
    %327 = vmatmul.mubr.f32.gmra.mxu0 %v258
    %v328 = vpop.f32.mrf.mxu0
    %v329 = vadd.f32 0.0, %v328
    %v330 = vpop.f32.mrf.mxu0
    %331 = vmatprep.mubr.f32.mxu0 0.0
    %332 = vmatmul.mubr.f32.gmra.mxu0 %v259
    %v333 = vpop.f32.mrf.mxu0
    %v334 = vadd.f32 0.0, %v333
    %v335 = vpop.f32.mrf.mxu0
    %336 = vmatprep.mubr.f32.mxu0 0.0
    %337 = vmatmul.mubr.f32.gmra.mxu0 %v260
    %v338 = vpop.f32.mrf.mxu0
    %v339 = vadd.f32 0.0, %v338
    %v340 = vpop.f32.mrf.mxu0
    %341 = vmatprep.mubr.f32.mxu0 0.0
    %342 = vmatmul.mubr.f32.gmra.mxu0 %v261
    %v343 = vpop.f32.mrf.mxu0
    %v344 = vadd.f32 0.0, %v343
    %v345 = vpop.f32.mrf.mxu0
    %346 = vdwg.mxu0
    %v347 = vmul.f32 %v240, %v329
    %v348 = vmul.f32 %v245, %v334
    %v349 = vmul.f32 %v250, %v339
    %v350 = vmul.f32 %v255, %v344
    %v351 = vadd.f32 %v347, %v348
    %v352 = vadd.f32 %v351, %v349
    %v353 = vadd.f32 %v352, %v350
    %v354 = vrot.slane %v353, 4
    %v355 = vadd.f32 %v353, %v354
    %v356 = vrot.slane %v355, 2
    %v357 = vadd.f32 %v355, %v356
    %v358 = vrot.slane %v357, 1
    %v359 = vadd.f32 %v357, %v358
    %360 = vst [vmem:[#allocation8] sm:$0x1] %v359
    // Predicated region
    $region30: #{tpu_custom_call.1} parent=1 // pred_check
      _
    $region31: #{tpu_custom_call.1} parent=1 // pred_check_branch
      %362 = sbr.rel (0) target = $region33
    $region32: #{tpu_custom_call.1} parent=1 // pred_region
      %s364 = ssub.s32 16, 16
      %365 = vsyncadd [#allocation4], %s364
      %s367 = sshll.u32 [#allocation8], 4
      %s368 = int_to_ptr.vmem [resolvable:$true] %s367
      %370 = dma.vmem_to_hbm [thread:$0]  %s368, 16, %s4, [#allocation4]
    $region33: #{tpu_custom_call.1} parent=1 // pred_fallthru
      _
    // Predicated region
    $region34: #{tpu_custom_call.1} parent=1 // pred_check
      _
    $region35: #{tpu_custom_call.1} parent=1 // pred_check_branch
      %372 = sbr.rel (0) target = $region37
    $region36: #{tpu_custom_call.1} parent=1 // pred_region
      %373 = dma.done [#allocation4], 16
    $region37: #{tpu_custom_call.1} parent=1 // pred_fallthru
      _
    %374 = vsyncpa [#allocation3], 1
    %375 = vsyncpa [#allocation6], 1
    %376 = vsyncpa [#allocation4], 1

</llo_original>
